<compile_context>
chip_gen: v5e
topology: v5e:2x2
jax: 0.10.0
libtpu: 0.0.40
codegen_flags: <defaults>
</compile_context>

<pallas_src>
import functools

import numpy as np

import jax
import jax.numpy as jnp
from jax.experimental import pallas as pl
from jax.experimental.pallas import tpu as pltpu


def _round_up(v: int, m: int) -> int:
    return (v + m - 1) // m * m


@functools.lru_cache(maxsize=None)
def _cos_dft_matrix(n: int, use_bf16: bool):
    """Full cosine DFT matrix C[k, m] = cos(2*pi*k*m/n) as a device array.

    Cached per (n, dtype) so it is uploaded once and passed as an argument
    instead of being baked as a fresh constant on every trace.
    """
    k = np.arange(n, dtype=np.float64)[:, None]
    m = np.arange(n, dtype=np.float64)[None, :]
    c = np.cos(2.0 * np.pi * k * m / n)
    dt = jnp.bfloat16 if use_bf16 else jnp.float32
    return jnp.asarray(c, dtype=dt)


def _dft_real_kernel(cos_ref, x_ref, o_ref):
    # One MXU pass per (batch, feature-tile) grid point: out = C @ x_tile.
    # The x cast to the cos operand dtype runs on the VPU and hides under the
    # MXU / DMA; f32 accumulation via preferred_element_type.
    x = x_ref[...].astype(cos_ref.dtype)
    o_ref[...] = jnp.dot(
        cos_ref[...], x, preferred_element_type=jnp.float32
    ).astype(o_ref.dtype)


def _pick_tile(d_pad: int, want_steps: int) -> int:
    """Largest lane tile in {512, 256, 128} dividing d_pad with >= want_steps."""
    for tn in (512, 256, 128):
        if d_pad % tn == 0 and d_pad // tn >= want_steps:
            return tn
    return 128  # d_pad is always a multiple of 128 here


def _dft_real(x3, cos, out_dtype):
    """x3: (B_eff, N, D_eff) with D_eff % 128 == 0. Returns (B_eff, N, D_eff)."""
    b, n, d = x3.shape
    # TODO(synk): sequences longer than ~2k would need a tiled reduction axis;
    # FNet/ViT sequence lengths keep the full (N, N) cosine tile small.

    want_steps = 2 if b == 1 else 1  # keep >= 2 parallel steps for v7x's 2 TCs
    tn = _pick_tile(d, want_steps)

    cos_bytes = cos.dtype.itemsize
    x_bytes = x3.dtype.itemsize
    o_bytes = jnp.dtype(out_dtype).itemsize

    def vmem_needed(t):
        # double-buffered cos + x tile + out tile
        return 2 * n * n * cos_bytes + 2 * n * t * (x_bytes + o_bytes)

    while tn > 128 and vmem_needed(tn) > 24 * 1024 * 1024:
        tn //= 2

    grid = (b, d // tn)

    return pl.pallas_call(
        _dft_real_kernel,
        out_shape=jax.ShapeDtypeStruct((b, n, d), out_dtype),
        grid_spec=pltpu.PrefetchScalarGridSpec(
            num_scalar_prefetch=0,
            grid=grid,
            in_specs=[
                # cos block index never changes -> fetched from HBM once.
                pl.BlockSpec((n, n), lambda bi, j: (0, 0)),
                # leading batch dim squeezed; lane axis tiled by tn.
                pl.BlockSpec((None, n, tn), lambda bi, j: (bi, 0, j)),
            ],
            out_specs=pl.BlockSpec((None, n, tn), lambda bi, j: (bi, 0, j)),
        ),
        compiler_params=pltpu.CompilerParams(
            dimension_semantics=("parallel", "parallel"),
            vmem_limit_bytes=32 * 1024 * 1024,
        ),
        cost_estimate=pl.CostEstimate(
            flops=2 * b * n * n * d,
            transcendentals=0,
            bytes_accessed=int(cos.size) * cos_bytes
            + b * n * d * (x_bytes + o_bytes),
        ),
    )(cos, x3)


@jax.jit
def _apply_direct(x, cos):
    # D is a multiple of 128: no transposes, kernel reads/writes (B, N, D).
    return _dft_real(x, cos, x.dtype)


@jax.jit
def _apply_folded(x, cos):
    # D not a multiple of 128: fold batch into the lane axis so kernel stores
    # stay lane-dense.  The dtype cast fuses into this (already required)
    # transpose pass.
    B, N, D = x.shape
    F = B * D
    F_pad = _round_up(F, 128)
    xf = jnp.transpose(x, (1, 0, 2)).reshape(N, F).astype(cos.dtype)
    if F_pad != F:
        xf = jnp.pad(xf, ((0, 0), (0, F_pad - F)))
    out = _dft_real(xf[None], cos, x.dtype)[0]        # (N, F_pad)
    return out[:, :F].reshape(N, B, D).transpose(1, 0, 2)


def fnet_block_sequence(x, use_bf16: bool = True):
    """Equivalent of FNetBlock_sequence.forward: Re(FFT(x, dim=-2)).

    x: (B, N, D) real array (batch, sequence, hidden).
    use_bf16: bf16 MXU operands (fast path, ~1e-2 rel. error vs fp32 FFT);
              False keeps f32 operands for tighter accuracy.
    """
    if jnp.issubdtype(x.dtype, jnp.complexfloating):
        # TODO(synk): complex inputs would also need the sin/imaginary term;
        # FNet feeds real activations so only the real-input path is built.
        raise NotImplementedError("fnet_block_sequence expects a real-valued input")

    _, N, D = x.shape
    cos = _cos_dft_matrix(N, bool(use_bf16))
    if D % 128 == 0:
        return _apply_direct(x, cos)
    return _apply_folded(x, cos)


if __name__ == "__main__":
    key = jax.random.PRNGKey(0)

    # --- fold path (D % 128 != 0): small shapes consistent with the module ---
    B, N, D = 2, 8, 32
    x = jax.random.normal(key, (B, N, D), dtype=jnp.float32)
    ref = jnp.fft.fft(x, axis=-2).real.astype(jnp.float32)
    scale = float(jnp.max(jnp.abs(ref))) + 1e-6

    out_f32 = jax.block_until_ready(fnet_block_sequence(x, use_bf16=False))
    assert out_f32.shape == (B, N, D)
    assert out_f32.dtype == x.dtype
    assert float(jnp.max(jnp.abs(out_f32 - ref))) / scale < 2e-2

    out_bf16 = jax.block_until_ready(fnet_block_sequence(x, use_bf16=True))
    assert out_bf16.shape == (B, N, D)
    assert float(jnp.max(jnp.abs(out_bf16 - ref))) / scale < 5e-2

    # --- direct path (D % 128 == 0): the optimized no-transpose path ---------
    B2, N2, D2 = 2, 8, 128
    x2 = jax.random.normal(jax.random.PRNGKey(1), (B2, N2, D2), dtype=jnp.float32)
    ref2 = jnp.fft.fft(x2, axis=-2).real.astype(jnp.float32)
    scale2 = float(jnp.max(jnp.abs(ref2))) + 1e-6

    out2 = jax.block_until_ready(fnet_block_sequence(x2, use_bf16=True))
    assert out2.shape == (B2, N2, D2)
    assert float(jnp.max(jnp.abs(out2 - ref2))) / scale2 < 5e-2

    print("KERNEL_OK")
</pallas_src>

<mosaic_0001>
module attributes {stable_mosaic.version = 11 : i64} {
  func.func @_dft_real_kernel(%arg0: i32, %arg1: i32, %arg2: memref<8x8xf32, #tpu.memory_space<vmem>>, %arg3: memref<1x8x128xf32, #tpu.memory_space<vmem>>, %arg4: memref<1x8x128xf32, #tpu.memory_space<vmem>>) attributes {dimension_semantics = [#tpu.dimension_semantics<parallel>, #tpu.dimension_semantics<parallel>], iteration_bounds = array<i64: 1, 1>, scalar_prefetch = 0 : i64, scratch_operands = 0 : i64, tpu.core_type = #tpu.core_type<tc>, window_params = [{pipeline_mode = #tpu.pipeline_mode<synchronous>, transform_indices = @transform_0, window_bounds = array<i64: 8, 8>}, {transform_indices = @transform_1, window_bounds = array<i64: 1, 8, 128>}, {transform_indices = @transform_2, window_bounds = array<i64: 1, 8, 128>}]} {
    %c0 = arith.constant 0 : index
    %c0_0 = arith.constant 0 : index
    %c0_1 = arith.constant 0 : index
    %0 = vector.load %arg3[%c0, %c0_0, %c0_1] : memref<1x8x128xf32, #tpu.memory_space<vmem>>, vector<1x8x128xf32>
    %1 = vector.shape_cast %0 : vector<1x8x128xf32> to vector<8x128xf32>
    %c0_2 = arith.constant 0 : index
    %c0_3 = arith.constant 0 : index
    %2 = vector.load %arg2[%c0_2, %c0_3] : memref<8x8xf32, #tpu.memory_space<vmem>>, vector<8x8xf32>
    %cst = arith.constant dense<0.000000e+00> : vector<8x128xf32>
    %3 = tpu.matmul %2, %1, %cst {dimension_numbers = #tpu.dot_dimension_numbers<[1], [0], [0], [1], [0, 0, 1, 1], [], []>} : vector<8x8xf32>, vector<8x128xf32>, vector<8x128xf32> -> vector<8x128xf32>
    %c0_4 = arith.constant 0 : index
    %c0_5 = arith.constant 0 : index
    %c0_6 = arith.constant 0 : index
    %4 = vector.load %arg4[%c0_4, %c0_5, %c0_6] : memref<1x8x128xf32, #tpu.memory_space<vmem>>, vector<1x8x128xf32>
    %5 = vector.shape_cast %4 : vector<1x8x128xf32> to vector<8x128xf32>
    %6 = vector.shape_cast %3 : vector<8x128xf32> to vector<1x8x128xf32>
    tpu.vector_store %arg4[%c0_4, %c0_5, %c0_6], %6 {strides = array<i32>} : memref<1x8x128xf32, #tpu.memory_space<vmem>>, vector<1x8x128xf32>,
    return
  }
  func.func @transform_0(%arg0: i32, %arg1: i32) -> (i32, i32) {
    %c0_i32 = arith.constant 0 : i32
    %c0_i32_0 = arith.constant 0 : i32
    %c0_i32_1 = arith.constant 0 : i32
    return %c0_i32, %c0_i32_0 : i32, i32
  }
  func.func @transform_1(%arg0: i32, %arg1: i32) -> (i32, i32, i32) {
    %c0_i32 = arith.constant 0 : i32
    %c0_i32_0 = arith.constant 0 : i32
    return %arg0, %c0_i32, %arg1 : i32, i32, i32
  }
  func.func @transform_2(%arg0: i32, %arg1: i32) -> (i32, i32, i32) {
    %c0_i32 = arith.constant 0 : i32
    %c0_i32_0 = arith.constant 0 : i32
    return %arg0, %c0_i32, %arg1 : i32, i32, i32
  }
}

</mosaic_0001>

<llo_original>
// kernel: _apply_folded.1
$region0: #{_apply_folded.1}
  #allocation0 [shape = 'u32[]', space=smem, size = 0x4, offset = 0x4, fixed_abs, tag = 'smem constant byte address 0x4 - core index']
  #allocation1 [shape = 'u32[72,128]{1,0:T(1,128)}', space=vmem, size = 0x9000, scoped, tag = 'internal scratch']
  %s0 = inlined_call_operand.vmem [shape: f32[8,8], index: 0, kind: input, shape index: {}]
  %s1 = inlined_call_operand.vmem [shape: f32[1,8,128], index: 1, kind: input, shape index: {}]
  %s2 = inlined_call_operand.vmem [shape: f32[1,8,128], index: 2, kind: output, shape index: {}]
  %s3 = sld [smem:[#allocation0]]
  $region18: #{_apply_folded.1} parent=0
    _
  %s5 = ssub.s32 1, %s3
  %s6 = scalar_select 0, %s5, %s3
  // Predicated region
  $region2: #{_apply_folded.1} parent=0 // pred_check
    _
  $region3: #{_apply_folded.1} parent=0 // pred_check_branch
    %8 = sbr.rel (0) target = $region5
  $region4: #{_apply_folded.1} parent=0 // pred_region
    _
  $region5: #{_apply_folded.1} parent=0 // pred_fallthru
    _
  // Predicated region
  $region6: #{_apply_folded.1} parent=0 // pred_check
    _
  $region7: #{_apply_folded.1} parent=0 // pred_check_branch
    %10 = sbr.rel (0) target = $region9
  $region8: #{_apply_folded.1} parent=0 // pred_region
    _
  $region9: #{_apply_folded.1} parent=0 // pred_fallthru
    _
  %v11 = vld [vmem:[%s1] sm:$0xff]
  %v12 = vld [vmem:[%s0] sm:$0xff]
  %vm13 = vcmask 64512
  %v15 = vsel %vm13, %v12, 0
  %17 = vmatpush.msra.mxu0 0.0
  %18 = vmatpush.msra.mxu0 0.0
  %19 = vmatpush.msra.mxu0 0.0
  %20 = vmatpush.msra.mxu0 0.0
  %21 = vmatpush.msra.mxu0 0.0
  %22 = vmatpush.msra.mxu0 0.0
  %23 = vmatpush.msra.mxu0 0.0
  %24 = vmatpush.msra.mxu0 0.0
  %25 = vmatpush.msra.mxu0 0.0
  %26 = vmatpush.msra.mxu0 0.0
  %27 = vmatpush.msra.mxu0 0.0
  %28 = vmatpush.msra.mxu0 0.0
  %29 = vmatpush.msra.mxu0 0.0
  %30 = vmatpush.msra.mxu0 0.0
  %31 = vmatpush.msra.mxu0 0.0
  %32 = vmatpush.msra.mxu0 %v11
  %33 = vmatmul.f32.gmra.mxu0 %v15
  %v34 = vpop.f32.mrf.mxu0
  %v35 = vadd.f32 0.0, %v34
  %36 = vdwg.mxu0
  %37 = vst [vmem:[%s2] sm:$0xff] %v35
  // Predicated region
  $region10: #{_apply_folded.1} parent=0 // pred_check
    _
  $region11: #{_apply_folded.1} parent=0 // pred_check_branch
    %39 = sbr.rel (0) target = $region13
  $region12: #{_apply_folded.1} parent=0 // pred_region
    _
  $region13: #{_apply_folded.1} parent=0 // pred_fallthru
    _
  // Predicated region
  $region14: #{_apply_folded.1} parent=0 // pred_check
    _
  $region15: #{_apply_folded.1} parent=0 // pred_check_branch
    %41 = sbr.rel (0) target = $region17
  $region16: #{_apply_folded.1} parent=0 // pred_region
    _
  $region17: #{_apply_folded.1} parent=0 // pred_fallthru
    _

</llo_original>
